<compile_context>
chip_gen: v5e
topology: v5e:2x2
jax: 0.10.0
libtpu: 0.0.40
codegen_flags: <defaults>
</compile_context>

<pallas_src>
import functools

import numpy as np
import jax
import jax.numpy as jnp
from jax.experimental import pallas as pl
from jax.experimental.pallas import tpu as pltpu


# --------------------------------------------------------------------------
# Host-side parameter setup (input-independent): per-circuit unitaries,
# Pauli-Z table, block-diagonal grouping and embedding-selection tables.
# --------------------------------------------------------------------------
def _ry(theta):
    c, s = np.cos(theta / 2.0), np.sin(theta / 2.0)
    return np.array([[c, -s], [s, c]], dtype=np.float64)


def _single_qubit_gate(g, wire, n):
    u = np.eye(1, dtype=np.float64)
    for w in range(n):
        u = np.kron(u, g if w == wire else np.eye(2, dtype=np.float64))
    return u


def _cnot(control, target, n):
    dim = 2 ** n
    u = np.zeros((dim, dim), dtype=np.float64)
    for src in range(dim):
        bit_c = (src >> (n - 1 - control)) & 1
        dst = src ^ ((1 << (n - 1 - target)) if bit_c else 0)
        u[dst, src] = 1.0
    return u


def build_circuit_unitary(weights, num_qubits):
    """weights: (n_layers, num_qubits) -> (2^n, 2^n) real unitary (wire 0 = MSB)."""
    dim = 2 ** num_qubits
    u = np.eye(dim, dtype=np.float64)
    for l in range(weights.shape[0]):
        for j in range(num_qubits):
            u = _single_qubit_gate(_ry(weights[l, j]), j, num_qubits) @ u
        if num_qubits > 1:
            for j in range(num_qubits):
                u = _cnot(j, (j + 1) % num_qubits, num_qubits) @ u
    return u


def build_zmat(num_qubits):
    """(2^n, num_qubits) table: Zmat[s, j] = <s|Z_j|s> = 1 - 2*bit_j(s)."""
    dim = 2 ** num_qubits
    s = np.arange(dim)[:, None]
    j = np.arange(num_qubits)[None, :]
    return (1.0 - 2.0 * ((s >> (num_qubits - 1 - j)) & 1)).astype(np.float32)


def choose_group(n_circuits, dim, max_lanes=1024):
    """Largest divisor G of n_circuits with G*dim <= max_lanes (>=1).

    Groups circuits so the block-diagonal matmul gets a wide lane extent while the
    (G*dim)^2 f32 unitary tile stays well inside scoped VMEM (<= 4 MiB)."""
    best = 1
    for g in range(1, n_circuits + 1):
        if n_circuits % g == 0 and g * dim <= max_lanes:
            best = g
    return best


def build_group_tables(unitaries_np, num_qubits, group):
    """Precompute the block-diagonal / selection tables consumed by the kernel."""
    n_circuits, dim, _ = unitaries_np.shape
    n_groups = n_circuits // group
    gd = group * dim

    # Block-diagonal transposed unitaries, one per group (off-diagonals exact 0).
    ubd_t = np.zeros((n_groups, gd, gd), dtype=np.float32)
    for i in range(n_groups):
        for g in range(group):
            u = unitaries_np[i * group + g]
            ubd_t[i, g * dim:(g + 1) * dim, g * dim:(g + 1) * dim] = u.T

    # Block-diagonal Pauli-Z expectation table (identical for every group).
    zmat = build_zmat(num_qubits)
    zbd = np.zeros((gd, group * num_qubits), dtype=np.float32)
    for g in range(group):
        zbd[g * dim:(g + 1) * dim, g * num_qubits:(g + 1) * num_qubits] = zmat

    # Angle replicate/select matrix: theta[b, j*gd + g*dim + s] = 0.5 * x[b, g*nq + j]
    emb = np.zeros((group * num_qubits, num_qubits * gd), dtype=np.float32)
    # Phase offsets: (pi/2) * bit_j(s), tiled over the circuits in a group.
    bit = np.zeros((1, num_qubits * gd), dtype=np.float32)
    for j in range(num_qubits):
        for g in range(group):
            base = j * gd + g * dim
            emb[g * num_qubits + j, base:base + dim] = 0.5
        bits = ((np.arange(dim) >> (num_qubits - 1 - j)) & 1).astype(np.float32)
        bit[0, j * gd:(j + 1) * gd] = np.tile(bits, group) * (np.pi / 2.0)

    return ubd_t, zbd, emb, bit


# --------------------------------------------------------------------------
# Pallas kernel: one grid step == one GROUP of quantum sub-circuits.
# --------------------------------------------------------------------------
def quantum_linear_kernel(x_ref, emb_ref, bit_ref, ubd_ref, zbd_ref, o_ref,
                          *, num_qubits, group, dim):
    gd = group * dim

    # 1) Angle embedding.  One MXU matmul replicates/selects the right angle for
    #    every statevector column; cos(x/2 - (pi/2)*bit) = cos(x/2) for bit=0 and
    #    sin(x/2) for bit=1, so no iota / shift / select is needed.
    theta = jnp.dot(x_ref[...], emb_ref[...],
                    preferred_element_type=jnp.float32)          # (B, nq*gd)
    amp = jnp.cos(theta - bit_ref[...])                          # (B, nq*gd)

    # Product state amplitudes: psi[b, g*dim+s] = prod_j amp[b, j*gd + g*dim + s].
    psi = amp[:, 0:gd]
    for j in range(1, num_qubits):                               # static unroll
        psi = psi * amp[:, j * gd:(j + 1) * gd]

    # 2) Apply all circuits of the group at once (block-diagonal U^T on the MXU).
    psi_out = jnp.dot(psi, ubd_ref[0], preferred_element_type=jnp.float32)
    probs = psi_out * psi_out

    # 3) Pauli-Z expectation values -> lane-dense (B, group*num_qubits) store.
    o_ref[...] = jnp.dot(probs, zbd_ref[...], preferred_element_type=jnp.float32)


def quantum_linear_forward(x, ubd_t, zbd, emb, bit, num_qubits, group):
    """x: (B, in_features) f32 -> (B, n_circuits * num_qubits) f32."""
    batch, in_features = x.shape
    dim = 2 ** num_qubits
    gd = group * dim
    n_groups = ubd_t.shape[0]
    assert in_features == n_groups * group * num_qubits

    # TODO(synk): for very large batch, add a batch grid axis (multiple of 8 rows,
    # marked "parallel") with group-independent index_maps for emb/bit/ubd/zbd.
    kern = functools.partial(quantum_linear_kernel,
                             num_qubits=num_qubits, group=group, dim=dim)
    return pl.pallas_call(
        kern,
        out_shape=jax.ShapeDtypeStruct((batch, in_features), jnp.float32),
        grid_spec=pltpu.PrefetchScalarGridSpec(
            num_scalar_prefetch=0,
            grid=(n_groups,),
            in_specs=[
                # lane-dense slice of x for this group of circuits (no reshape)
                pl.BlockSpec((batch, group * num_qubits), lambda i: (0, i)),
                # group-invariant tables stay resident across grid steps
                pl.BlockSpec((group * num_qubits, num_qubits * gd), lambda i: (0, 0)),
                pl.BlockSpec((1, num_qubits * gd), lambda i: (0, 0)),
                # per-group block-diagonal transposed unitary
                pl.BlockSpec((1, gd, gd), lambda i: (i, 0, 0)),
                pl.BlockSpec((gd, group * num_qubits), lambda i: (0, 0)),
            ],
            out_specs=pl.BlockSpec((batch, group * num_qubits), lambda i: (0, i)),
        ),
        compiler_params=pltpu.CompilerParams(
            dimension_semantics=("parallel",)),   # independent blocks -> v7x megacore
    )(x, emb, bit, ubd_t, zbd)


# --------------------------------------------------------------------------
# Pure-JAX reference simulation (correctness check only).
# --------------------------------------------------------------------------
def reference_forward(x, unitaries, zmat, num_qubits):
    batch, in_features = x.shape
    n_circuits = in_features // num_qubits
    xr = x.reshape(batch, n_circuits, num_qubits)
    outs = []
    for i in range(n_circuits):
        xi = xr[:, i, :]
        c, s = jnp.cos(xi / 2.0), jnp.sin(xi / 2.0)
        psi = jnp.ones((batch, 1), jnp.float32)
        for j in range(num_qubits):
            q = jnp.stack([c[:, j], s[:, j]], axis=-1)          # (B, 2)
            psi = (psi[:, :, None] * q[:, None, :]).reshape(batch, -1)
        psi = psi @ unitaries[i].T
        outs.append((psi * psi) @ zmat)
    return jnp.concatenate(outs, axis=1)


if __name__ == "__main__":
    batch = 2
    in_features = 16
    num_qubits = 4          # -> n_circuits = 4, statevector dim = 16
    n_layers = 2
    n_circuits = in_features // num_qubits
    dim = 2 ** num_qubits

    key = jax.random.PRNGKey(0)
    kx, kw = jax.random.split(key)
    x = jax.random.normal(kx, (batch, in_features), dtype=jnp.float32)
    weights = jax.random.uniform(
        kw, (n_circuits, n_layers, num_qubits),
        minval=0.0, maxval=2.0 * np.pi, dtype=jnp.float32)
    weights_np = np.asarray(weights, dtype=np.float64)

    unitaries_np = np.stack(
        [build_circuit_unitary(weights_np[i], num_qubits)
         for i in range(n_circuits)]).astype(np.float32)

    group = choose_group(n_circuits, dim)          # demo: all 4 circuits -> 1 grid step
    ubd_t, zbd, emb, bit = build_group_tables(unitaries_np, num_qubits, group)
    ubd_t = jnp.asarray(ubd_t)
    zbd = jnp.asarray(zbd)
    emb = jnp.asarray(emb)
    bit = jnp.asarray(bit)

    out = quantum_linear_forward(x, ubd_t, zbd, emb, bit, num_qubits, group)
    out = jax.block_until_ready(out)

    ref = reference_forward(x, jnp.asarray(unitaries_np),
                            jnp.asarray(build_zmat(num_qubits)), num_qubits)
    assert out.shape == (batch, in_features), out.shape
    assert jnp.allclose(out, ref, atol=1e-4), (out, ref)
    print("KERNEL_OK")
</pallas_src>

<mosaic_0001>
module attributes {stable_mosaic.version = 11 : i64} {
  func.func @quantum_linear_kernel(%arg0: i32, %arg1: memref<2x16xf32, #tpu.memory_space<vmem>>, %arg2: memref<16x256xf32, #tpu.memory_space<vmem>>, %arg3: memref<1x256xf32, #tpu.memory_space<vmem>>, %arg4: memref<1x64x64xf32, #tpu.memory_space<vmem>>, %arg5: memref<64x16xf32, #tpu.memory_space<vmem>>, %arg6: memref<2x16xf32, #tpu.memory_space<vmem>>) attributes {dimension_semantics = [#tpu.dimension_semantics<parallel>], iteration_bounds = array<i64: 1>, scalar_prefetch = 0 : i64, scratch_operands = 0 : i64, tpu.core_type = #tpu.core_type<tc>, window_params = [{transform_indices = @transform_0, window_bounds = array<i64: 2, 16>}, {pipeline_mode = #tpu.pipeline_mode<synchronous>, transform_indices = @transform_1, window_bounds = array<i64: 16, 256>}, {pipeline_mode = #tpu.pipeline_mode<synchronous>, transform_indices = @transform_2, window_bounds = array<i64: 1, 256>}, {transform_indices = @transform_3, window_bounds = array<i64: 1, 64, 64>}, {pipeline_mode = #tpu.pipeline_mode<synchronous>, transform_indices = @transform_4, window_bounds = array<i64: 64, 16>}, {transform_indices = @transform_5, window_bounds = array<i64: 2, 16>}]} {
    %c0 = arith.constant 0 : index
    %c0_0 = arith.constant 0 : index
    %0 = vector.load %arg1[%c0, %c0_0] : memref<2x16xf32, #tpu.memory_space<vmem>>, vector<2x16xf32>
    %c0_1 = arith.constant 0 : index
    %c0_2 = arith.constant 0 : index
    %1 = vector.load %arg2[%c0_1, %c0_2] : memref<16x256xf32, #tpu.memory_space<vmem>>, vector<16x256xf32>
    %cst = arith.constant dense<0.000000e+00> : vector<2x256xf32>
    %2 = tpu.matmul %0, %1, %cst {dimension_numbers = #tpu.dot_dimension_numbers<[1], [0], [0], [1], [0, 0, 1, 1], [], []>} : vector<2x16xf32>, vector<16x256xf32>, vector<2x256xf32> -> vector<2x256xf32>
    %c0_3 = arith.constant 0 : index
    %c0_4 = arith.constant 0 : index
    %3 = vector.load %arg3[%c0_3, %c0_4] : memref<1x256xf32, #tpu.memory_space<vmem>>, vector<1x256xf32>
    %4 = vector.broadcast %3 : vector<1x256xf32> to vector<2x256xf32>
    %5 = arith.subf %2, %4 : vector<2x256xf32>
    %6 = math.cos %5 : vector<2x256xf32>
    %7 = vector.extract_strided_slice %6 {offsets = [0, 0], sizes = [2, 64], strides = [1, 1]} : vector<2x256xf32> to vector<2x64xf32>
    %8 = vector.extract_strided_slice %6 {offsets = [0, 64], sizes = [2, 64], strides = [1, 1]} : vector<2x256xf32> to vector<2x64xf32>
    %9 = arith.mulf %7, %8 : vector<2x64xf32>
    %10 = vector.extract_strided_slice %6 {offsets = [0, 128], sizes = [2, 64], strides = [1, 1]} : vector<2x256xf32> to vector<2x64xf32>
    %11 = arith.mulf %9, %10 : vector<2x64xf32>
    %12 = vector.extract_strided_slice %6 {offsets = [0, 192], sizes = [2, 64], strides = [1, 1]} : vector<2x256xf32> to vector<2x64xf32>
    %13 = arith.mulf %11, %12 : vector<2x64xf32>
    %c0_5 = arith.constant 0 : index
    %c0_6 = arith.constant 0 : index
    %c0_7 = arith.constant 0 : index
    %14 = vector.load %arg4[%c0_5, %c0_6, %c0_7] : memref<1x64x64xf32, #tpu.memory_space<vmem>>, vector<1x64x64xf32>
    %15 = vector.shape_cast %14 : vector<1x64x64xf32> to vector<64x64xf32>
    %cst_8 = arith.constant dense<0.000000e+00> : vector<2x64xf32>
    %16 = tpu.matmul %13, %15, %cst_8 {dimension_numbers = #tpu.dot_dimension_numbers<[1], [0], [0], [1], [0, 0, 1, 1], [], []>} : vector<2x64xf32>, vector<64x64xf32>, vector<2x64xf32> -> vector<2x64xf32>
    %17 = arith.mulf %16, %16 : vector<2x64xf32>
    %c0_9 = arith.constant 0 : index
    %c0_10 = arith.constant 0 : index
    %18 = vector.load %arg5[%c0_9, %c0_10] : memref<64x16xf32, #tpu.memory_space<vmem>>, vector<64x16xf32>
    %cst_11 = arith.constant dense<0.000000e+00> : vector<2x16xf32>
    %19 = tpu.matmul %17, %18, %cst_11 {dimension_numbers = #tpu.dot_dimension_numbers<[1], [0], [0], [1], [0, 0, 1, 1], [], []>} : vector<2x64xf32>, vector<64x16xf32>, vector<2x16xf32> -> vector<2x16xf32>
    %c0_12 = arith.constant 0 : index
    %c0_13 = arith.constant 0 : index
    %20 = vector.load %arg6[%c0_12, %c0_13] : memref<2x16xf32, #tpu.memory_space<vmem>>, vector<2x16xf32>
    tpu.vector_store %arg6[%c0_12, %c0_13], %19 {strides = array<i32>} : memref<2x16xf32, #tpu.memory_space<vmem>>, vector<2x16xf32>,
    return
  }
  func.func @transform_0(%arg0: i32) -> (i32, i32) {
    %c0_i32 = arith.constant 0 : i32
    %c0_i32_0 = arith.constant 0 : i32
    return %c0_i32, %arg0 : i32, i32
  }
  func.func @transform_1(%arg0: i32) -> (i32, i32) {
    %c0_i32 = arith.constant 0 : i32
    %c0_i32_0 = arith.constant 0 : i32
    %c0_i32_1 = arith.constant 0 : i32
    return %c0_i32, %c0_i32_0 : i32, i32
  }
  func.func @transform_2(%arg0: i32) -> (i32, i32) {
    %c0_i32 = arith.constant 0 : i32
    %c0_i32_0 = arith.constant 0 : i32
    %c0_i32_1 = arith.constant 0 : i32
    return %c0_i32, %c0_i32_0 : i32, i32
  }
  func.func @transform_3(%arg0: i32) -> (i32, i32, i32) {
    %c0_i32 = arith.constant 0 : i32
    %c0_i32_0 = arith.constant 0 : i32
    %c0_i32_1 = arith.constant 0 : i32
    return %arg0, %c0_i32, %c0_i32_0 : i32, i32, i32
  }
  func.func @transform_4(%arg0: i32) -> (i32, i32) {
    %c0_i32 = arith.constant 0 : i32
    %c0_i32_0 = arith.constant 0 : i32
    %c0_i32_1 = arith.constant 0 : i32
    return %c0_i32, %c0_i32_0 : i32, i32
  }
  func.func @transform_5(%arg0: i32) -> (i32, i32) {
    %c0_i32 = arith.constant 0 : i32
    %c0_i32_0 = arith.constant 0 : i32
    return %c0_i32, %arg0 : i32, i32
  }
}

</mosaic_0001>

<llo_original>
// kernel: tpu_custom_call.1
$region0: #{tpu_custom_call.1}
  #allocation0 [shape = 'u32[]', space=smem, size = 0x4, offset = 0x4, fixed_abs, tag = 'smem constant byte address 0x4 - core index']
  #allocation1 [shape = 'u32[72,128]{1,0:T(1,128)}', space=vmem, size = 0x9000, scoped, tag = 'internal scratch']
  %s0 = inlined_call_operand.vmem [shape: f32[2,16], index: 0, kind: input, shape index: {}]
  %s1 = inlined_call_operand.hbm [shape: f32[16,256], index: 1, kind: input, shape index: {}]
  %s2 = inlined_call_operand.vmem [shape: f32[1,256], index: 2, kind: input, shape index: {}]
  %s3 = inlined_call_operand.vmem [shape: f32[1,64,64], index: 3, kind: input, shape index: {}]
  %s4 = inlined_call_operand.vmem [shape: f32[64,16], index: 4, kind: input, shape index: {}]
  %s5 = inlined_call_operand.hbm [shape: f32[2,16], index: 5, kind: output, shape index: {}]
  %s6 = sld [smem:[#allocation0]]
  $region34: #{tpu_custom_call.1} parent=0
    _
  %s8 = ssub.s32 1, %s6
  %s9 = scalar_select 0, %s8, %s6
  $region1: #{tpu_custom_call.1} parent=0
    #allocation2 [shape = 'u8[16384]{0}', space=vmem, size = 0x4000, scoped, tag = 'input window, operand 1, single buffered']
    #allocation3 [shape = 's32[1]{0}', space=sflag, size = 0x4, scoped, tag = 'scoped memory for tpu_custom_call.1']
    #allocation4 [shape = 's32[1]{0}', space=sflag, size = 0x4, scoped, tag = 'scoped memory for tpu_custom_call.1']
    #allocation5 [shape = 'u8[1024]{0}', space=vmem, size = 0x400, scoped, tag = 'output window, operand 0, single buffered']
    %10 = vsyncpa [#allocation3], 0
    %11 = vsyncpa [#allocation4], 0
    // Predicated region
    $region2: #{tpu_custom_call.1} parent=1 // pred_check
      _
    $region3: #{tpu_custom_call.1} parent=1 // pred_check_branch
      %13 = sbr.rel (0) target = $region5
    $region4: #{tpu_custom_call.1} parent=1 // pred_region
      _
    $region5: #{tpu_custom_call.1} parent=1 // pred_fallthru
      _
    // Predicated region
    $region6: #{tpu_custom_call.1} parent=1 // pred_check
      _
    $region7: #{tpu_custom_call.1} parent=1 // pred_check_branch
      %15 = sbr.rel (0) target = $region9
    $region8: #{tpu_custom_call.1} parent=1 // pred_region
      %17 = vsyncadd [#allocation3], 0
      %s18 = sshll.u32 %s1, 4
      %s19 = int_to_ptr.hbm [resolvable:$true] %s18
      %s20 = sshll.u32 [#allocation2], 4
      %s21 = int_to_ptr.vmem [resolvable:$true] %s20
      %26 = dma.hbm_to_vmem [thread:$0]  %s19, 512, %s21, [#allocation3], 256, 256, 16
    $region9: #{tpu_custom_call.1} parent=1 // pred_fallthru
      _
    // Predicated region
    $region10: #{tpu_custom_call.1} parent=1 // pred_check
      _
    $region11: #{tpu_custom_call.1} parent=1 // pred_check_branch
      %28 = sbr.rel (0) target = $region13
    $region12: #{tpu_custom_call.1} parent=1 // pred_region
      _
    $region13: #{tpu_custom_call.1} parent=1 // pred_fallthru
      _
    // Predicated region
    $region14: #{tpu_custom_call.1} parent=1 // pred_check
      _
    $region15: #{tpu_custom_call.1} parent=1 // pred_check_branch
      %30 = sbr.rel (0) target = $region17
    $region16: #{tpu_custom_call.1} parent=1 // pred_region
      _
    $region17: #{tpu_custom_call.1} parent=1 // pred_fallthru
      _
    // Predicated region
    $region18: #{tpu_custom_call.1} parent=1 // pred_check
      _
    $region19: #{tpu_custom_call.1} parent=1 // pred_check_branch
      %32 = sbr.rel (0) target = $region21
    $region20: #{tpu_custom_call.1} parent=1 // pred_region
      _
    $region21: #{tpu_custom_call.1} parent=1 // pred_fallthru
      _
    // Predicated region
    $region22: #{tpu_custom_call.1} parent=1 // pred_check
      _
    $region23: #{tpu_custom_call.1} parent=1 // pred_check_branch
      %34 = sbr.rel (0) target = $region25
    $region24: #{tpu_custom_call.1} parent=1 // pred_region
      %36 = dma.done [#allocation3], 512
    $region25: #{tpu_custom_call.1} parent=1 // pred_fallthru
      _
    %v37 = vld [vmem:[%s0] sm:$0x3]
    %v38 = vld [vmem:[#allocation2] sm:$0xff]
    %v39 = vld [vmem:[#allocation2 + $0x8] sm:$0xff]
    %v40 = vld [vmem:[#allocation2 + $0x10] sm:$0xff]
    %v41 = vld [vmem:[#allocation2 + $0x18] sm:$0xff]
    %vm42 = vcmask 130048
    %v44 = vsel %vm42, %v37, 0
    %46 = vmatpush.msra.mxu0 0.0
    %47 = vmatpush.msra.mxu0 0.0
    %48 = vmatpush.msra.mxu0 0.0
    %49 = vmatpush.msra.mxu0 0.0
    %50 = vmatpush.msra.mxu0 0.0
    %51 = vmatpush.msra.mxu0 0.0
    %52 = vmatpush.msra.mxu0 0.0
    %53 = vmatpush.msra.mxu0 0.0
    %54 = vmatpush.msra.mxu0 0.0
    %55 = vmatpush.msra.mxu0 0.0
    %56 = vmatpush.msra.mxu0 0.0
    %57 = vmatpush.msra.mxu0 0.0
    %58 = vmatpush.msra.mxu0 0.0
    %59 = vmatpush.msra.mxu0 0.0
    %60 = vmatpush.msra.mxu0 %v40
    %61 = vmatpush.msra.mxu0 %v38
    %62 = vmatmul.f32.gmra.mxu0 %v44
    %v63 = vpop.f32.mrf.mxu0
    %v64 = vadd.f32 0.0, %v63
    %65 = vdwg.mxu0
    %66 = vmatpush.msra.mxu0 0.0
    %67 = vmatpush.msra.mxu0 0.0
    %68 = vmatpush.msra.mxu0 0.0
    %69 = vmatpush.msra.mxu0 0.0
    %70 = vmatpush.msra.mxu0 0.0
    %71 = vmatpush.msra.mxu0 0.0
    %72 = vmatpush.msra.mxu0 0.0
    %73 = vmatpush.msra.mxu0 0.0
    %74 = vmatpush.msra.mxu0 0.0
    %75 = vmatpush.msra.mxu0 0.0
    %76 = vmatpush.msra.mxu0 0.0
    %77 = vmatpush.msra.mxu0 0.0
    %78 = vmatpush.msra.mxu0 0.0
    %79 = vmatpush.msra.mxu0 0.0
    %80 = vmatpush.msra.mxu0 %v41
    %81 = vmatpush.msra.mxu0 %v39
    %82 = vmatmul.f32.gmra.mxu0 %v44
    %v83 = vpop.f32.mrf.mxu0
    %v84 = vadd.f32 0.0, %v83
    %85 = vdwg.mxu0
    %v86 = vld [vmem:[%s2] sm:$0x3]
    %v88 = vperm.slane %v86, 0
    %v89 = vperm.slane %v86, 1
    %v92 = vsub.f32 %v64, %v88
    %v93 = vsub.f32 %v84, %v89
    %v94 = vand.u32 2147483647, %v92
    %vm95 = vcmp.le.f32.partialorder %v94, 0.7853982
    %vm96 = vcmp.lt.s32.totalorder %v92, 0
    %v97 = vand.u32 %v92, 2139095040
    %v98 = vshrl.u32 %v97, 23
    %v99 = vsub.s32 %v98, 127
    %v100 = vand.u32 2147483647, %v92
    %v101 = vand.u32 %v100, 8388607
    %v102 = vor.u32 %v101, 8388608
    %v103 = vsub.s32 0, %v102
    %v104 = vadd.s32 %v99, 1
    %vm105 = vcmp.gt.s32.totalorder %v104, 0
    %v106 = vsel %vm105, %v104, 0
    %v107 = vshrl.u32 %v106, 5
    %v108 = vand.u32 %v106, 31
    %v109 = vsub.s32 32, %v108
    %v110 = vshrl.u32 683565275, %v109
    %v111 = vshll.u32 683565275, %v108
    %v112 = vshrl.u32 2475754826, %v109
    %v113 = vor.u32 %v111, %v112
    %v114 = vshll.u32 2475754826, %v108
    %v115 = vshrl.u32 2131351028, %v109
    %v116 = vor.u32 %v114, %v115
    %v117 = vshll.u32 2131351028, %v108
    %v118 = vshrl.u32 2102212464, %v109
    %v119 = vor.u32 %v117, %v118
    %v120 = vshll.u32 2102212464, %v108
    %v121 = vshrl.u32 920167782, %v109
    %v122 = vor.u32 %v120, %v121
    %v123 = vshll.u32 920167782, %v108
    %v124 = vshrl.u32 1326507024, %v109
    %v125 = vor.u32 %v123, %v124
    %vm126 = vcmp.lt.s32.totalorder %v107, 1
    %vm127 = vcmp.lt.s32.totalorder %v107, 2
    %vm128 = vcmp.lt.s32.totalorder %v107, 3
    %vm129 = vcmp.lt.s32.totalorder %v107, 4
    %v130 = vsel %vm126, %v110, %v113
    %v131 = vsel %vm129, %v119, 2102212464
    %v132 = vsel %vm128, %v116, %v131
    %v133 = vsel %vm127, %v130, %v132
    %v134 = vsel %vm126, %v113, %v116
    %v135 = vsel %vm129, %v122, 920167782
    %v136 = vsel %vm128, %v119, %v135
    %v137 = vsel %vm127, %v134, %v136
    %v138 = vsel %vm126, %v116, %v119
    %v139 = vsel %vm129, %v125, 1326507024
    %v140 = vsel %vm128, %v122, %v139
    %v141 = vsel %vm127, %v138, %v140
    %v142 = vshll.u32 %v102, 8
    %v143 = vand.u32 %v142, 65535
    %v144 = vshrl.u32 %v142, 16
    %v145 = vand.u32 %v141, 65535
    %v146 = vshrl.u32 %v141, 16
    %v147 = vmul.u32 %v143, %v145
    %v148 = vmul.u32 %v143, %v146
    %v149 = vmul.u32 %v144, %v145
    %v150 = vmul.u32 %v144, %v146
    %v151 = vshll.u32 %v148, 16
    %v152 = vshrl.u32 %v148, 16
    %v153 = vshll.u32 %v149, 16
    %v154 = vshrl.u32 %v149, 16
    %vm155 = vc.u32 %v147, %v151
    %v156 = vsel %vm155, 1, 0
    %v157 = vadd.s32 %v147, %v151
    %v158 = vadd.s32 %v150, %v156
    %vm159 = vc.u32 %v157, %v153
    %v160 = vsel %vm159, 1, 0
    %v161 = vadd.s32 %v157, %v153
    %v162 = vadd.s32 %v158, %v160
    %v163 = vadd.s32 %v162, %v152
    %v164 = vadd.s32 %v163, %v154
    %v165 = vand.u32 %v142, 65535
    %v166 = vshrl.u32 %v142, 16
    %v167 = vand.u32 %v137, 65535
    %v168 = vshrl.u32 %v137, 16
    %v169 = vmul.u32 %v165, %v167
    %v170 = vmul.u32 %v165, %v168
    %v171 = vmul.u32 %v166, %v167
    %v172 = vmul.u32 %v166, %v168
    %v173 = vshll.u32 %v170, 16
    %v174 = vshrl.u32 %v170, 16
    %v175 = vshll.u32 %v171, 16
    %v176 = vshrl.u32 %v171, 16
    %vm177 = vc.u32 %v169, %v173
    %v178 = vsel %vm177, 1, 0
    %v179 = vadd.s32 %v169, %v173
    %v180 = vadd.s32 %v172, %v178
    %vm181 = vc.u32 %v179, %v175
    %v182 = vsel %vm181, 1, 0
    %v183 = vadd.s32 %v179, %v175
    %v184 = vadd.s32 %v180, %v182
    %v185 = vadd.s32 %v184, %v174
    %v186 = vadd.s32 %v185, %v176
    %v187 = vmul.u32 %v142, %v133
    %v188 = vadd.s32 %v164, %v183
    %vm189 = vc.u32 %v164, %v183
    %v190 = vadd.s32 %v186, 1
    %v191 = vsel %vm189, %v190, %v186
    %v192 = vadd.s32 %v187, %v191
    %v193 = vadd.s32 %v192, 536870912
    %v194 = vshrl.u32 %v193, 30
    %v195 = vshll.u32 %v194, 30
    %v196 = vsub.s32 %v192, %v195
    %vm197 = vcmp.lt.s32.totalorder %v196, 0
    %v198 = vsub.s32 0, %v196
    %v199 = vsel %vm197, %v198, %v196
    %v200 = vclz %v199
    %v201 = vsub.s32 %v200, 2
    %vm202 = vcmp.gt.s32.totalorder 0, %v201
    %v203 = vsel %vm202, 0, %v201
    %v204 = vsub.s32 32, %v203
    %v205 = vshll.u32 %v196, %v203
    %v206 = vshrl.u32 %v188, %v204
    %v207 = vor.u32 %v205, %v206
    %v208 = vsub.s32 4294967266, %v203
    %v209 = vadd.s32 %v208, 127
    %v210 = vshll.u32 %v209, 23
    %v211 = vor.u32 4788187, %v210
    %v212 = vand.u32 2147483647, %v211
    %v214 = vcvt.s32.f32 %v207
    %v215 = vmul.f32 %v214, %v212
    %v216 = vxor.u32 %v215, 2147483648
    %v217 = vsel %vm96, %v216, %v215
    %v218 = vsub.s32 4, %v194
    %v219 = vsel %vm96, %v218, %v194
    %v220 = vsel %vm95, %v92, %v217
    %v221 = vsel %vm95, 0, %v219
    %v222 = vmul.f32 %v220, %v220
    %v223 = vmul.f32 %v222, -0.001358992
    %v224 = vadd.f32 %v223, 0.041655596
    %v225 = vmul.f32 %v222, %v224
    %v226 = vadd.f32 %v225, -0.4999988
    %v227 = vmul.f32 %v222, %v226
    %v228 = vadd.f32 1.0, %v227
    %v229 = vmul.f32 %v220, %v220
    %v230 = vmul.f32 %v229, -0.00019511016
    %v231 = vadd.f32 %v230, 0.008332121
    %v232 = vmul.f32 %v229, %v231
    %v233 = vadd.f32 %v232, -0.16666654
    %v234 = vmul.f32 %v229, %v233
    %v235 = vadd.f32 %v234, 1.0
    %v236 = vmul.f32 %v235, %v220
    %vm237 = vweird.f32 %v92
    %v238 = vand.u32 %v221, 3
    %vm239 = vcmp.lt.s32.totalorder %v238, 2
    %vm240 = vcmp.eq.s32.totalorder %v238, 0
    %v241 = vxor.u32 %v236, 2147483648
    %v242 = vsel %vm240, %v228, %v241
    %vm243 = vcmp.eq.s32.totalorder %v238, 2
    %v244 = vxor.u32 %v228, 2147483648
    %v245 = vsel %vm243, %v244, %v236
    %v246 = vsel %vm239, %v242, %v245
    %v247 = vsel %vm237, nan, %v246
    %v248 = vand.u32 2147483647, %v93
    %vm249 = vcmp.le.f32.partialorder %v248, 0.7853982
    %vm250 = vcmp.lt.s32.totalorder %v93, 0
    %v251 = vand.u32 %v93, 2139095040
    %v252 = vshrl.u32 %v251, 23
    %v253 = vsub.s32 %v252, 127
    %v254 = vand.u32 2147483647, %v93
    %v255 = vand.u32 %v254, 8388607
    %v256 = vor.u32 %v255, 8388608
    %v257 = vsub.s32 0, %v256
    %v258 = vadd.s32 %v253, 1
    %vm259 = vcmp.gt.s32.totalorder %v258, 0
    %v260 = vsel %vm259, %v258, 0
    %v261 = vshrl.u32 %v260, 5
    %v262 = vand.u32 %v260, 31
    %v263 = vsub.s32 32, %v262
    %v264 = vshrl.u32 683565275, %v263
    %v265 = vshll.u32 683565275, %v262
    %v266 = vshrl.u32 2475754826, %v263
    %v267 = vor.u32 %v265, %v266
    %v268 = vshll.u32 2475754826, %v262
    %v269 = vshrl.u32 2131351028, %v263
    %v270 = vor.u32 %v268, %v269
    %v271 = vshll.u32 2131351028, %v262
    %v272 = vshrl.u32 2102212464, %v263
    %v273 = vor.u32 %v271, %v272
    %v274 = vshll.u32 2102212464, %v262
    %v275 = vshrl.u32 920167782, %v263
    %v276 = vor.u32 %v274, %v275
    %v277 = vshll.u32 920167782, %v262
    %v278 = vshrl.u32 1326507024, %v263
    %v279 = vor.u32 %v277, %v278
    %vm280 = vcmp.lt.s32.totalorder %v261, 1
    %vm281 = vcmp.lt.s32.totalorder %v261, 2
    %vm282 = vcmp.lt.s32.totalorder %v261, 3
    %vm283 = vcmp.lt.s32.totalorder %v261, 4
    %v284 = vsel %vm280, %v264, %v267
    %v285 = vsel %vm283, %v273, 2102212464
    %v286 = vsel %vm282, %v270, %v285
    %v287 = vsel %vm281, %v284, %v286
    %v288 = vsel %vm280, %v267, %v270
    %v289 = vsel %vm283, %v276, 920167782
    %v290 = vsel %vm282, %v273, %v289
    %v291 = vsel %vm281, %v288, %v290
    %v292 = vsel %vm280, %v270, %v273
    %v293 = vsel %vm283, %v279, 1326507024
    %v294 = vsel %vm282, %v276, %v293
    %v295 = vsel %vm281, %v292, %v294
    %v296 = vshll.u32 %v256, 8
    %v297 = vand.u32 %v296, 65535
    %v298 = vshrl.u32 %v296, 16
    %v299 = vand.u32 %v295, 65535
    %v300 = vshrl.u32 %v295, 16
    %v301 = vmul.u32 %v297, %v299
    %v302 = vmul.u32 %v297, %v300
    %v303 = vmul.u32 %v298, %v299
    %v304 = vmul.u32 %v298, %v300
    %v305 = vshll.u32 %v302, 16
    %v306 = vshrl.u32 %v302, 16
    %v307 = vshll.u32 %v303, 16
    %v308 = vshrl.u32 %v303, 16
    %vm309 = vc.u32 %v301, %v305
    %v310 = vsel %vm309, 1, 0
    %v311 = vadd.s32 %v301, %v305
    %v312 = vadd.s32 %v304, %v310
    %vm313 = vc.u32 %v311, %v307
    %v314 = vsel %vm313, 1, 0
    %v315 = vadd.s32 %v311, %v307
    %v316 = vadd.s32 %v312, %v314
    %v317 = vadd.s32 %v316, %v306
    %v318 = vadd.s32 %v317, %v308
    %v319 = vand.u32 %v296, 65535
    %v320 = vshrl.u32 %v296, 16
    %v321 = vand.u32 %v291, 65535
    %v322 = vshrl.u32 %v291, 16
    %v323 = vmul.u32 %v319, %v321
    %v324 = vmul.u32 %v319, %v322
    %v325 = vmul.u32 %v320, %v321
    %v326 = vmul.u32 %v320, %v322
    %v327 = vshll.u32 %v324, 16
    %v328 = vshrl.u32 %v324, 16
    %v329 = vshll.u32 %v325, 16
    %v330 = vshrl.u32 %v325, 16
    %vm331 = vc.u32 %v323, %v327
    %v332 = vsel %vm331, 1, 0
    %v333 = vadd.s32 %v323, %v327
    %v334 = vadd.s32 %v326, %v332
    %vm335 = vc.u32 %v333, %v329
    %v336 = vsel %vm335, 1, 0
    %v337 = vadd.s32 %v333, %v329
    %v338 = vadd.s32 %v334, %v336
    %v339 = vadd.s32 %v338, %v328
    %v340 = vadd.s32 %v339, %v330
    %v341 = vmul.u32 %v296, %v287
    %v342 = vadd.s32 %v318, %v337
    %vm343 = vc.u32 %v318, %v337
    %v344 = vadd.s32 %v340, 1
    %v345 = vsel %vm343, %v344, %v340
    %v346 = vadd.s32 %v341, %v345
    %v347 = vadd.s32 %v346, 536870912
    %v348 = vshrl.u32 %v347, 30
    %v349 = vshll.u32 %v348, 30
    %v350 = vsub.s32 %v346, %v349
    %vm351 = vcmp.lt.s32.totalorder %v350, 0
    %v352 = vsub.s32 0, %v350
    %v353 = vsel %vm351, %v352, %v350
    %v354 = vclz %v353
    %v355 = vsub.s32 %v354, 2
    %vm356 = vcmp.gt.s32.totalorder 0, %v355
    %v357 = vsel %vm356, 0, %v355
    %v358 = vsub.s32 32, %v357
    %v359 = vshll.u32 %v350, %v357
    %v360 = vshrl.u32 %v342, %v358
    %v361 = vor.u32 %v359, %v360
    %v362 = vsub.s32 4294967266, %v357
    %v363 = vadd.s32 %v362, 127
    %v364 = vshll.u32 %v363, 23
    %v365 = vor.u32 4788187, %v364
    %v366 = vand.u32 2147483647, %v365
    %v368 = vcvt.s32.f32 %v361
    %v369 = vmul.f32 %v368, %v366
    %v370 = vxor.u32 %v369, 2147483648
    %v371 = vsel %vm250, %v370, %v369
    %v372 = vsub.s32 4, %v348
    %v373 = vsel %vm250, %v372, %v348
    %v374 = vsel %vm249, %v93, %v371
    %v375 = vsel %vm249, 0, %v373
    %v376 = vmul.f32 %v374, %v374
    %v377 = vmul.f32 %v376, -0.001358992
    %v378 = vadd.f32 %v377, 0.041655596
    %v379 = vmul.f32 %v376, %v378
    %v380 = vadd.f32 %v379, -0.4999988
    %v381 = vmul.f32 %v376, %v380
    %v382 = vadd.f32 1.0, %v381
    %v383 = vmul.f32 %v374, %v374
    %v384 = vmul.f32 %v383, -0.00019511016
    %v385 = vadd.f32 %v384, 0.008332121
    %v386 = vmul.f32 %v383, %v385
    %v387 = vadd.f32 %v386, -0.16666654
    %v388 = vmul.f32 %v383, %v387
    %v389 = vadd.f32 %v388, 1.0
    %v390 = vmul.f32 %v389, %v374
    %vm391 = vweird.f32 %v93
    %v392 = vand.u32 %v375, 3
    %vm393 = vcmp.lt.s32.totalorder %v392, 2
    %vm394 = vcmp.eq.s32.totalorder %v392, 0
    %v395 = vxor.u32 %v390, 2147483648
    %v396 = vsel %vm394, %v382, %v395
    %vm397 = vcmp.eq.s32.totalorder %v392, 2
    %v398 = vxor.u32 %v382, 2147483648
    %v399 = vsel %vm397, %v398, %v390
    %v400 = vsel %vm393, %v396, %v399
    %v401 = vsel %vm391, nan, %v400
    %403 = vrot.lane.b32.xlu0 %v247, 64
    %v404 = vpop.permute.xlu0 %403
    %v406 = vmul.f32 %v247, %v404
    %v407 = vmul.f32 %v406, %v401
    %409 = vrot.lane.b32.xlu0 %v401, 64
    %v410 = vpop.permute.xlu0 %409
    %v412 = vmul.f32 %v407, %v410
    %v413 = vld [vmem:[%s3] sm:$0xff]
    %v414 = vld [vmem:[%s3 + $0x8] sm:$0xff]
    %v415 = vld [vmem:[%s3 + $0x10] sm:$0xff]
    %v416 = vld [vmem:[%s3 + $0x18] sm:$0xff]
    %v417 = vld [vmem:[%s3 + $0x20] sm:$0xff]
    %v418 = vld [vmem:[%s3 + $0x28] sm:$0xff]
    %v419 = vld [vmem:[%s3 + $0x30] sm:$0xff]
    %v420 = vld [vmem:[%s3 + $0x38] sm:$0xff]
    %vm421 = vcmask 523264
    %v423 = vsel %vm421, %v412, 0
    %425 = vmatpush.msra.mxu0 0.0
    %426 = vmatpush.msra.mxu0 0.0
    %427 = vmatpush.msra.mxu0 0.0
    %428 = vmatpush.msra.mxu0 0.0
    %429 = vmatpush.msra.mxu0 0.0
    %430 = vmatpush.msra.mxu0 0.0
    %431 = vmatpush.msra.mxu0 0.0
    %432 = vmatpush.msra.mxu0 0.0
    %433 = vmatpush.msra.mxu0 %v420
    %434 = vmatpush.msra.mxu0 %v419
    %435 = vmatpush.msra.mxu0 %v418
    %436 = vmatpush.msra.mxu0 %v417
    %437 = vmatpush.msra.mxu0 %v416
    %438 = vmatpush.msra.mxu0 %v415
    %439 = vmatpush.msra.mxu0 %v414
    %440 = vmatpush.msra.mxu0 %v413
    %441 = vmatmul.f32.gmra.mxu0 %v423
    %v442 = vpop.f32.mrf.mxu0
    %v443 = vadd.f32 0.0, %v442
    %444 = vdwg.mxu0
    %v445 = vmul.f32 %v443, %v443
    %v446 = vld [vmem:[%s4] sm:$0xff]
    %v447 = vld [vmem:[%s4 + $0x8] sm:$0xff]
    %v448 = vld [vmem:[%s4 + $0x10] sm:$0xff]
    %v449 = vld [vmem:[%s4 + $0x18] sm:$0xff]
    %v450 = vld [vmem:[%s4 + $0x20] sm:$0xff]
    %v451 = vld [vmem:[%s4 + $0x28] sm:$0xff]
    %v452 = vld [vmem:[%s4 + $0x30] sm:$0xff]
    %v453 = vld [vmem:[%s4 + $0x38] sm:$0xff]
    %v455 = vsel %vm421, %v445, 0
    %457 = vmatpush.msra.mxu0 0.0
    %458 = vmatpush.msra.mxu0 0.0
    %459 = vmatpush.msra.mxu0 0.0
    %460 = vmatpush.msra.mxu0 0.0
    %461 = vmatpush.msra.mxu0 0.0
    %462 = vmatpush.msra.mxu0 0.0
    %463 = vmatpush.msra.mxu0 0.0
    %464 = vmatpush.msra.mxu0 0.0
    %465 = vmatpush.msra.mxu0 %v453
    %466 = vmatpush.msra.mxu0 %v452
    %467 = vmatpush.msra.mxu0 %v451
    %468 = vmatpush.msra.mxu0 %v450
    %469 = vmatpush.msra.mxu0 %v449
    %470 = vmatpush.msra.mxu0 %v448
    %471 = vmatpush.msra.mxu0 %v447
    %472 = vmatpush.msra.mxu0 %v446
    %473 = vmatmul.f32.gmra.mxu0 %v455
    %v474 = vpop.f32.mrf.mxu0
    %v475 = vadd.f32 0.0, %v474
    %476 = vdwg.mxu0
    %vm477 = vcmask 123904
    %478 = vst.msk [vmem:[#allocation5] sm:$0x3] %vm477, %v475
    // Predicated region
    $region26: #{tpu_custom_call.1} parent=1 // pred_check
      _
    $region27: #{tpu_custom_call.1} parent=1 // pred_check_branch
      %480 = sbr.rel (0) target = $region29
    $region28: #{tpu_custom_call.1} parent=1 // pred_region
      %482 = vsyncadd [#allocation4], 0
      %s484 = sshll.u32 [#allocation5], 4
      %s485 = int_to_ptr.vmem [resolvable:$true] %s484
      %s486 = sshll.u32 %s5, 4
      %s487 = int_to_ptr.hbm [resolvable:$true] %s486
      %489 = dma.vmem_to_hbm [thread:$0]  %s485, 32, %s487, [#allocation4]
    $region29: #{tpu_custom_call.1} parent=1 // pred_fallthru
      _
    // Predicated region
    $region30: #{tpu_custom_call.1} parent=1 // pred_check
      _
    $region31: #{tpu_custom_call.1} parent=1 // pred_check_branch
      %491 = sbr.rel (0) target = $region33
    $region32: #{tpu_custom_call.1} parent=1 // pred_region
      %493 = dma.done [#allocation4], 32
    $region33: #{tpu_custom_call.1} parent=1 // pred_fallthru
      _
    %494 = vsyncpa [#allocation3], 1
    %495 = vsyncpa [#allocation4], 1

</llo_original>
